<compile_context>
chip_gen: v7x
topology: tpu7x:2x2x1
jax: 0.10.0
libtpu: 0.0.40
codegen_flags: <defaults>
</compile_context>

<pallas_src>
import functools

import jax
import jax.numpy as jnp
from jax.experimental import pallas as pl
from jax.experimental.pallas import tpu as pltpu


def _cdiv(a, b):
    return (a + b - 1) // b


def _round_up(a, b):
    return _cdiv(a, b) * b


def _downsample_kernel(*refs, neg_slope, pack_all):
    # pack_all=True : refs = (plane, w, b, o)
    #   plane: (1, TH, Wo_p, 9*cin_p) bf16, channel index = (kh*3+kw)*cin_p + c
    #   w    : (9*cin_p, cout_p) bf16 (BN scale folded in)
    # pack_all=False: refs = (p_even, p_odd, w, b, o)
    #   p_even: (1, TH+1, Wo_p, 3*cin_p) bf16, row i = even padded row (kh=0 at +0, kh=2 at +1)
    #   p_odd : (1, TH,   Wo_p, 3*cin_p) bf16, row i = odd padded row  (kh=1)
    #   w     : (3, 3*cin_p, cout_p) bf16
    # b: (1, cout_p) f32 folded BN bias.   o: (1, TH, Wo_p, TN) bf16 (lane-dense).
    if pack_all:
        p_ref, w_ref, b_ref, o_ref = refs
    else:
        p0_ref, p1_ref, w_ref, b_ref, o_ref = refs

    th, wo, tn = o_ref.shape[1], o_ref.shape[2], o_ref.shape[3]
    m = th * wo
    j = pl.program_id(1)
    off = pl.multiple_of(j * tn, tn)          # aligned Cout-tile offset into resident W/b

    if pack_all:
        x = p_ref[0].reshape(m, p_ref.shape[-1])                       # (M, 9*cin_p)
        w = w_ref[:, pl.ds(off, tn)]                                   # (9*cin_p, TN)
        acc = jnp.dot(x, w, preferred_element_type=jnp.float32)        # single deep-K dot
    else:
        kc = p0_ref.shape[-1]
        x0 = p0_ref[0, 0:th, :, :].reshape(m, kc)                      # kh = 0
        x1 = p1_ref[0].reshape(m, kc)                                  # kh = 1
        x2 = p0_ref[0, 1:th + 1, :, :].reshape(m, kc)                  # kh = 2 (halo row)
        acc = jnp.dot(x0, w_ref[0, :, pl.ds(off, tn)],
                      preferred_element_type=jnp.float32)
        acc += jnp.dot(x1, w_ref[1, :, pl.ds(off, tn)],
                       preferred_element_type=jnp.float32)
        acc += jnp.dot(x2, w_ref[2, :, pl.ds(off, tn)],
                       preferred_element_type=jnp.float32)

    y = acc + b_ref[:, pl.ds(off, tn)]                                 # (M, TN) f32
    y = jnp.maximum(y, neg_slope * y)                                  # LeakyReLU (slope < 1)
    o_ref[...] = y.reshape(1, th, wo, tn).astype(o_ref.dtype)          # bf16 lane-dense store


def downsample_forward(x, weight, gamma, beta, running_mean, running_var,
                       eps=1e-5, neg_slope=0.01, block_oh=16):
    """x: (N, Cin, H, W) f32 NCHW.  weight: (Cout, Cin, 3, 3).  Returns NCHW f32."""
    N, Cin, H, W = x.shape
    Cout = weight.shape[0]
    k, stride, pad = 3, 2, 1
    Ho = (H + 2 * pad - k) // stride + 1
    Wo = (W + 2 * pad - k) // stride + 1

    cin_p = _round_up(Cin, 8)
    cout_p = _round_up(Cout, 128)          # lane-dense stores (see padding note in header)
    wo_p = _round_up(Wo, 8)                # sublane-aligned in-kernel reshapes

    kind = jax.devices()[0].device_kind.lower()
    tn = 256 if (cout_p % 256 == 0 and "v5" not in kind) else 128   # v5e: 128-wide MXUs
    nj = cout_p // tn

    pack_all = cin_p <= 64                 # small Cin -> single plane, one K=9*cin_p dot

    # ---- tile height under a v7x-safe VMEM budget (double-buffered planes + resident W) ----
    def vmem_bytes(th_):
        m_ = th_ * wo_p
        if pack_all:
            planes_b = 2 * (th_ * wo_p * 9 * cin_p * 2)
        else:
            planes_b = 2 * ((th_ + 1) * wo_p * 3 * cin_p * 2) + 2 * (th_ * wo_p * 3 * cin_p * 2)
        w_b = 9 * cin_p * cout_p * 2 + cout_p * 4
        out_b = 2 * (m_ * tn * 2)
        acc_b = 2 * (m_ * tn * 4)
        return planes_b + w_b + out_b + acc_b

    th = max(1, min(block_oh, Ho))
    while th > 1 and vmem_bytes(th) > (40 << 20):
        th = max(1, th // 2)
    nb = _cdiv(Ho, th)
    ho_p = nb * th
    vmem_limit = min(64 << 20, max(32 << 20, vmem_bytes(th) + (8 << 20)))

    # ---- fold BatchNorm (running stats, inference semantics) into weights / bias ----
    scale = gamma / jnp.sqrt(running_var + eps)                           # (Cout,)
    bias = beta - running_mean * scale                                    # (Cout,)
    w = jnp.transpose(weight, (2, 3, 1, 0)) * scale                       # (3,3,Cin,Cout)
    w = jnp.pad(w, ((0, 0), (0, 0), (0, cin_p - Cin), (0, cout_p - Cout)))
    bias_p = jnp.pad(bias, (0, cout_p - Cout)).reshape(1, cout_p).astype(jnp.float32)

    # ---- phase-plane construction (NHWC transpose + one fused pad, parity-exact slices) ----
    x_nhwc = jnp.transpose(x, (0, 2, 3, 1))                               # (N, H, W, Cin)
    xp = jnp.pad(x_nhwc, ((0, 0), (1, 1), (1, 1), (0, cin_p - Cin)))      # (N, H+2, W+2, cin_p)

    def kw_pack(rows):
        # rows: (N, R, W+2, cin_p); out[n, r, ow, kw*cin_p + c] = rows[n, r, 2*ow + kw, c]
        cols = [rows[:, :, kw:kw + 2 * Wo - 1:2, :] for kw in range(3)]   # 3 x (N,R,Wo,cin_p)
        t = jnp.concatenate(cols, axis=-1)                                 # (N, R, Wo, 3*cin_p)
        return jnp.pad(t, ((0, 0), (0, 0), (0, wo_p - Wo), (0, 0)))

    if pack_all:
        # Single plane with all 9 taps packed channel-wise (no halo, no banding).
        taps = [kw_pack(xp[:, kh:kh + 2 * Ho - 1:2, :, :]) for kh in range(3)]  # 3x(N,Ho,wo_p,3cin_p)
        plane = jnp.concatenate(taps, axis=-1)                             # (N, Ho, wo_p, 9*cin_p)
        plane = jnp.pad(plane, ((0, 0), (0, ho_p - Ho), (0, 0), (0, 0)))
        plane = plane.reshape(N * nb, th, wo_p, 9 * cin_p).astype(jnp.bfloat16)
        w_mat = w.reshape(9 * cin_p, cout_p).astype(jnp.bfloat16)
        planes = [plane]
        plane_specs = [pl.BlockSpec((1, th, wo_p, 9 * cin_p), lambda m, j: (m, 0, 0, 0))]
        w_spec = pl.BlockSpec((9 * cin_p, cout_p), lambda m, j: (0, 0))    # constant -> fetched once
    else:
        kc = 3 * cin_p
        # Even padded rows (kh=0 / kh=2): Ho+1 rows, banded into TH-row blocks + 1 halo row.
        even = kw_pack(xp[:, 0:2 * Ho + 1:2, :, :])                        # (N, Ho+1, wo_p, kc)
        even = jnp.pad(even, ((0, 0), (0, ho_p - Ho), (0, 0), (0, 0)))     # (N, ho_p+1, wo_p, kc)
        main = even[:, :ho_p].reshape(N, nb, th, wo_p, kc)
        halo = even[:, th::th][:, :, None]                                 # (N, nb, 1, wo_p, kc)
        p0 = jnp.concatenate([main, halo], axis=2)
        p0 = p0.reshape(N * nb, th + 1, wo_p, kc).astype(jnp.bfloat16)
        # Odd padded rows (kh=1): exactly Ho rows, no halo (works for odd H too).
        odd = kw_pack(xp[:, 1:2 * Ho:2, :, :])                             # (N, Ho, wo_p, kc)
        odd = jnp.pad(odd, ((0, 0), (0, ho_p - Ho), (0, 0), (0, 0)))
        p1 = odd.reshape(N * nb, th, wo_p, kc).astype(jnp.bfloat16)
        w_mat = w.reshape(3, kc, cout_p).astype(jnp.bfloat16)
        planes = [p0, p1]
        plane_specs = [pl.BlockSpec((1, th + 1, wo_p, kc), lambda m, j: (m, 0, 0, 0)),
                       pl.BlockSpec((1, th, wo_p, kc), lambda m, j: (m, 0, 0, 0))]
        w_spec = pl.BlockSpec((3, kc, cout_p), lambda m, j: (0, 0, 0))     # constant -> fetched once

    b_spec = pl.BlockSpec((1, cout_p), lambda m, j: (0, 0))
    out_spec = pl.BlockSpec((1, th, wo_p, tn), lambda m, j: (m, 0, 0, j))

    out = pl.pallas_call(
        functools.partial(_downsample_kernel, neg_slope=neg_slope, pack_all=pack_all),
        out_shape=jax.ShapeDtypeStruct((N * nb, th, wo_p, cout_p), jnp.bfloat16),
        grid_spec=pltpu.PrefetchScalarGridSpec(
            num_scalar_prefetch=0,
            grid=(N * nb, nj),
            in_specs=plane_specs + [w_spec, b_spec],
            out_specs=out_spec),
        compiler_params=pltpu.CompilerParams(
            dimension_semantics=("parallel", "parallel"),
            vmem_limit_bytes=vmem_limit),
    )(*planes, w_mat, bias_p)

    # (N*nb, th, wo_p, cout_p) bf16 -> (N, Cout, Ho, Wo) f32 (PyTorch layout contract;
    # NHWC consumers should take the cropped NHWC slab directly and skip the transpose).
    out = out.reshape(N, nb * th, wo_p, cout_p)[:, :Ho, :Wo, :Cout].astype(jnp.float32)
    return jnp.transpose(out, (0, 3, 1, 2))


def _reference(x, weight, gamma, beta, running_mean, running_var,
               eps=1e-5, neg_slope=0.01):
    # XLA conv with the same bf16 operand quantization, f32 accumulation, and bf16
    # output rounding as the kernel (isolates logic errors from dtype choices).
    scale = gamma / jnp.sqrt(running_var + eps)
    bias = beta - running_mean * scale
    x_q = x.astype(jnp.bfloat16).astype(jnp.float32)
    w_q = (weight * scale[:, None, None, None]).astype(jnp.bfloat16).astype(jnp.float32)
    ref = jax.lax.conv_general_dilated(
        x_q, w_q, window_strides=(2, 2), padding=((1, 1), (1, 1)),
        dimension_numbers=("NCHW", "OIHW", "NCHW"),
        precision=jax.lax.Precision.HIGHEST)
    ref = ref + bias[None, :, None, None]
    ref = jnp.where(ref > 0, ref, neg_slope * ref)
    return ref.astype(jnp.bfloat16).astype(jnp.float32)


if __name__ == "__main__":
    key = jax.random.PRNGKey(0)

    def make_inputs(k, N, Cin, H, W, Cout):
        ks = jax.random.split(k, 6)
        x = jax.random.normal(ks[0], (N, Cin, H, W), dtype=jnp.float32)
        weight = jax.random.normal(ks[1], (Cout, Cin, 3, 3), dtype=jnp.float32) * 0.1
        gamma = 1.0 + 0.1 * jax.random.normal(ks[2], (Cout,), dtype=jnp.float32)
        beta = 0.1 * jax.random.normal(ks[3], (Cout,), dtype=jnp.float32)
        running_mean = 0.1 * jax.random.normal(ks[4], (Cout,), dtype=jnp.float32)
        running_var = jnp.abs(jax.random.normal(ks[5], (Cout,), dtype=jnp.float32)) + 0.5
        return x, weight, gamma, beta, running_mean, running_var

    k1, k2 = jax.random.split(key)

    # Case 1: small Cin -> single fully-packed plane path (one K=9*cin_p dot).
    args1 = make_inputs(k1, 2, 4, 16, 16, 8)
    out1 = jax.block_until_ready(downsample_forward(*args1))
    assert out1.shape == (2, 8, 8, 8), out1.shape
    ref1 = _reference(*args1)
    err1 = float(jnp.max(jnp.abs(out1 - ref1)))
    assert jnp.allclose(out1, ref1, atol=2e-2, rtol=2e-2), err1

    # Case 2: larger Cin + odd H/W -> two row-parity kw-packed planes (3 chained dots),
    # also exercises the odd-H fix and the Wo padding path.
    args2 = make_inputs(k2, 1, 72, 15, 13, 8)
    out2 = jax.block_until_ready(downsample_forward(*args2))
    assert out2.shape == (1, 8, 8, 7), out2.shape
    ref2 = _reference(*args2)
    err2 = float(jnp.max(jnp.abs(out2 - ref2)))
    assert jnp.allclose(out2, ref2, atol=2e-2, rtol=2e-2), err2

    print("KERNEL_OK")
</pallas_src>

<mosaic_0001>
module attributes {stable_mosaic.version = 11 : i64} {
  func.func @_downsample_kernel(%arg0: i32, %arg1: i32, %arg2: memref<1x8x8x72xbf16, #tpu.memory_space<vmem>>, %arg3: memref<72x128xbf16, #tpu.memory_space<vmem>>, %arg4: memref<1x128xf32, #tpu.memory_space<vmem>>, %arg5: memref<1x8x8x128xbf16, #tpu.memory_space<vmem>>) attributes {dimension_semantics = [#tpu.dimension_semantics<parallel>, #tpu.dimension_semantics<parallel>], iteration_bounds = array<i64: 2, 1>, scalar_prefetch = 0 : i64, scratch_operands = 0 : i64, tpu.core_type = #tpu.core_type<tc>, window_params = [{transform_indices = @transform_0, window_bounds = array<i64: 1, 8, 8, 72>}, {pipeline_mode = #tpu.pipeline_mode<synchronous>, transform_indices = @transform_1, window_bounds = array<i64: 72, 128>}, {pipeline_mode = #tpu.pipeline_mode<synchronous>, transform_indices = @transform_2, window_bounds = array<i64: 1, 128>}, {transform_indices = @transform_3, window_bounds = array<i64: 1, 8, 8, 128>}]} {
    %c128_i32 = arith.constant 128 : i32
    %0 = arith.muli %arg1, %c128_i32 : i32
    %1 = tpu.assume_multiple %0, 128 : i32
    %c0 = arith.constant 0 : index
    %c0_0 = arith.constant 0 : index
    %c0_1 = arith.constant 0 : index
    %c0_2 = arith.constant 0 : index
    %2 = vector.load %arg2[%c0, %c0_0, %c0_1, %c0_2] : memref<1x8x8x72xbf16, #tpu.memory_space<vmem>>, vector<1x8x8x72xbf16>
    %3 = vector.shape_cast %2 : vector<1x8x8x72xbf16> to vector<8x8x72xbf16>
    %4 = vector.shape_cast %3 : vector<8x8x72xbf16> to vector<64x72xbf16>
    %c0_3 = arith.constant 0 : index
    %5 = arith.index_cast %1 : i32 to index
    %6 = vector.load %arg3[%c0_3, %5] : memref<72x128xbf16, #tpu.memory_space<vmem>>, vector<72x128xbf16>
    %cst = arith.constant dense<0.000000e+00> : vector<64x128xf32>
    %7 = tpu.matmul %4, %6, %cst {dimension_numbers = #tpu.dot_dimension_numbers<[1], [0], [0], [1], [0, 0, 1, 1], [], []>} : vector<64x72xbf16>, vector<72x128xbf16>, vector<64x128xf32> -> vector<64x128xf32>
    %c0_4 = arith.constant 0 : index
    %8 = arith.index_cast %1 : i32 to index
    %9 = vector.load %arg4[%c0_4, %8] : memref<1x128xf32, #tpu.memory_space<vmem>>, vector<1x128xf32>
    %10 = vector.broadcast %9 : vector<1x128xf32> to vector<64x128xf32>
    %11 = arith.addf %7, %10 : vector<64x128xf32>
    %cst_5 = arith.constant 0.00999999977 : f32
    %12 = vector.broadcast %cst_5 : f32 to vector<64x128xf32>
    %13 = arith.mulf %12, %11 : vector<64x128xf32>
    %14 = arith.maximumf %11, %13 : vector<64x128xf32>
    %15 = vector.shape_cast %14 : vector<64x128xf32> to vector<1x8x8x128xf32>
    %16 = arith.truncf %15 : vector<1x8x8x128xf32> to vector<1x8x8x128xbf16>
    %c0_6 = arith.constant 0 : index
    %c0_7 = arith.constant 0 : index
    %c0_8 = arith.constant 0 : index
    %c0_9 = arith.constant 0 : index
    %17 = vector.load %arg5[%c0_6, %c0_7, %c0_8, %c0_9] : memref<1x8x8x128xbf16, #tpu.memory_space<vmem>>, vector<1x8x8x128xbf16>
    tpu.vector_store %arg5[%c0_6, %c0_7, %c0_8, %c0_9], %16 {strides = array<i32>} : memref<1x8x8x128xbf16, #tpu.memory_space<vmem>>, vector<1x8x8x128xbf16>,
    return
  }
  func.func @transform_0(%arg0: i32, %arg1: i32) -> (i32, i32, i32, i32) {
    %c0_i32 = arith.constant 0 : i32
    %c0_i32_0 = arith.constant 0 : i32
    %c0_i32_1 = arith.constant 0 : i32
    %c0_i32_2 = arith.constant 0 : i32
    return %arg0, %c0_i32, %c0_i32_0, %c0_i32_1 : i32, i32, i32, i32
  }
  func.func @transform_1(%arg0: i32, %arg1: i32) -> (i32, i32) {
    %c0_i32 = arith.constant 0 : i32
    %c0_i32_0 = arith.constant 0 : i32
    %c0_i32_1 = arith.constant 0 : i32
    return %c0_i32, %c0_i32_0 : i32, i32
  }
  func.func @transform_2(%arg0: i32, %arg1: i32) -> (i32, i32) {
    %c0_i32 = arith.constant 0 : i32
    %c0_i32_0 = arith.constant 0 : i32
    %c0_i32_1 = arith.constant 0 : i32
    return %c0_i32, %c0_i32_0 : i32, i32
  }
  func.func @transform_3(%arg0: i32, %arg1: i32) -> (i32, i32, i32, i32) {
    %c0_i32 = arith.constant 0 : i32
    %c0_i32_0 = arith.constant 0 : i32
    %c0_i32_1 = arith.constant 0 : i32
    return %arg0, %c0_i32, %c0_i32_0, %arg1 : i32, i32, i32, i32
  }
}

</mosaic_0001>

<llo_original>
// kernel: tpu_custom_call.1
$region0: #{tpu_custom_call.1}
  #allocation0 [shape = 'u32[]', space=smem, size = 0x4, offset = 0x4, fixed_abs, tag = 'smem constant byte address 0x4 - core index']
  #allocation1 [shape = 'u32[144,128]{1,0:T(1,128)}', space=vmem, size = 0x12000, scoped, tag = 'internal scratch']
  %s0 = inlined_call_operand.hbm [shape: bf16[2,8,8,72], index: 0, kind: input, shape index: {}]
  %s1 = inlined_call_operand.hbm [shape: bf16[72,128], index: 1, kind: input, shape index: {}]
  %s2 = inlined_call_operand.vmem [shape: f32[1,128], index: 2, kind: input, shape index: {}]
  %s3 = inlined_call_operand.hbm [shape: bf16[2,8,8,128], index: 3, kind: output, shape index: {}]
  %s4 = sld [smem:[#allocation0]]
  $region53: #{tpu_custom_call.1} parent=0
    _
  %s6 = ssub.s32 1, %s4
  %s7 = scalar_select 0, %s6, %s4
  $region1: #{tpu_custom_call.1} parent=0
    #allocation2 [shape = 'u8[32768]{0}', space=vmem, size = 0x8000, scoped, tag = 'input window, operand 0']
    #allocation3 [shape = 's32[2]{0}', space=sflag, size = 0x8, scoped, tag = 'scoped memory for tpu_custom_call.1']
    #allocation4 [shape = 's32[2]{0}', space=sflag, size = 0x8, scoped, tag = 'scoped memory for tpu_custom_call.1']
    #allocation5 [shape = 'u8[18432]{0}', space=vmem, size = 0x4800, scoped, tag = 'input window, operand 1, single buffered']
    #allocation6 [shape = 's32[1]{0}', space=sflag, size = 0x4, scoped, tag = 'scoped memory for tpu_custom_call.1']
    #allocation7 [shape = 'u8[32768]{0}', space=vmem, size = 0x8000, scoped, tag = 'output window, operand 0']
    %8 = vsyncpa [#allocation3], 0
    %s9 = scalar_lea.sflag [#allocation3], 1
    %10 = vsyncpa %s9, 0
    %11 = vsyncpa [#allocation6], 0
    %12 = vsyncpa [#allocation4], 0
    %s13 = scalar_lea.sflag [#allocation4], 1
    %14 = vsyncpa %s13, 0
    loop: start=0, step=1, limit=4
    $region2: #{tpu_custom_call.1} parent=1 // loop_pre_header
      _
    $region3: #{tpu_custom_call.1} parent=1 // loop_header
      %s16 = sphi 0, %s20
      %p17 = scmp.ge.s32.totalorder %s16, 4
      %s23 = sphi 0, %s35
      %s24 = sphi 0, %s31
      %s25 = sphi 0, %s23
      %s26 = sphi 0, %s24
      %s27 = sphi 0, %s25
      %s28 = sphi 0, %s26
      %s38 = sphi 0, %s40
      %s41 = sphi 0, %s38
      %s42 = sphi 0, %s41
      %s58 = sphi 0, %s42
      %s62 = sphi 0, %s62
      %s64 = sphi 0, %s62
      %s65 = sphi 0, %s64
      %s79 = sphi 0, %s65
      %s83 = sphi 0, %s83
      %s85 = sphi 0, %s83
      %s86 = sphi 0, %s85
      %s100 = sphi 0, %s86
      %s108 = sphi 0, %s110
      %s111 = sphi 0, %s108
      %s112 = sphi 0, %s111
      %s128 = sphi 0, %s112
    $region4: #{tpu_custom_call.1} parent=1 // loop_header_branch
      %19 = sbr.rel (%p17) target = $region8
    $region5: #{tpu_custom_call.1} parent=1 // loop_body
      %s21 = ssub.s32 %s16, 1
      %s22 = ssub.s32 %s16, 2
      %s29 = sadd.s32 1, %s24
      %p30 = scmp.ge.s32.totalorder %s29, 1
      %s31 = scalar_select %p30, 0, %s29
      %s32 = sadd.s32 1, %s23
      %s33 = scalar_select %p30, %s32, %s23
      %p34 = scmp.ge.s32.totalorder %s33, 2
      %s35 = scalar_select %p34, 0, %s33
      %s36 = ssub.s32 %s23, %s35
      %p37 = scmp.eq.s32.totalorder %s36, 0
      %s39 = sadd.s32 %s38, 1
      %s40 = scalar_select %p37, %s38, %s39
      %p43 = pneg %p37
      %p44 = scmp.eq.s32.totalorder %s16, 1
      %p45 = por %p43, %p44
      %p46 = scmp.ne.s32.totalorder %s38, %s41
      %p47 = scmp.eq.s32.totalorder %s16, 0
      %p48 = por %p46, %p47
      %p49 = scmp.ne.s32.totalorder %s38, %s41
      %p50 = scmp.eq.s32.totalorder %s21, 1
      %p51 = por %p49, %p50
      %p52 = scmp.ne.s32.totalorder %s41, %s42
      %p53 = scmp.eq.s32.totalorder %s21, 0
      %p54 = por %p52, %p53
      %p55 = scmp.ne.s32.totalorder %s41, %s42
      %p56 = scmp.eq.s32.totalorder %s22, 1
      %p57 = por %p55, %p56
      %p59 = scmp.ne.s32.totalorder %s42, %s58
      %p60 = scmp.eq.s32.totalorder %s22, 0
      %p61 = por %p59, %p60
      %s63 = sadd.s32 %s62, 1
      %p66 = scmp.eq.s32.totalorder %s16, 1
      %p67 = scmp.ne.s32.totalorder %s62, %s64
      %p68 = scmp.eq.s32.totalorder %s16, 0
      %p69 = por %p67, %p68
      %p70 = scmp.ne.s32.totalorder %s62, %s64
      %p71 = scmp.eq.s32.totalorder %s21, 1
      %p72 = por %p70, %p71
      %p73 = scmp.ne.s32.totalorder %s64, %s65
      %p74 = scmp.eq.s32.totalorder %s21, 0
      %p75 = por %p73, %p74
      %p76 = scmp.ne.s32.totalorder %s64, %s65
      %p77 = scmp.eq.s32.totalorder %s22, 1
      %p78 = por %p76, %p77
      %p80 = scmp.ne.s32.totalorder %s65, %s79
      %p81 = scmp.eq.s32.totalorder %s22, 0
      %p82 = por %p80, %p81
      %s84 = sadd.s32 %s83, 1
      %p87 = scmp.eq.s32.totalorder %s16, 1
      %p88 = scmp.ne.s32.totalorder %s83, %s85
      %p89 = scmp.eq.s32.totalorder %s16, 0
      %p90 = por %p88, %p89
      %p91 = scmp.ne.s32.totalorder %s83, %s85
      %p92 = scmp.eq.s32.totalorder %s21, 1
      %p93 = por %p91, %p92
      %p94 = scmp.ne.s32.totalorder %s85, %s86
      %p95 = scmp.eq.s32.totalorder %s21, 0
      %p96 = por %p94, %p95
      %p97 = scmp.ne.s32.totalorder %s85, %s86
      %p98 = scmp.eq.s32.totalorder %s22, 1
      %p99 = por %p97, %p98
      %p101 = scmp.ne.s32.totalorder %s86, %s100
      %p102 = scmp.eq.s32.totalorder %s22, 0
      %p103 = por %p101, %p102
      %s104 = ssub.s32 %s23, %s35
      %s105 = ssub.s32 %s24, %s31
      %s106 = sor.u32 %s104, %s105
      %p107 = scmp.eq.s32.totalorder %s106, 0
      %s109 = sadd.s32 %s108, 1
      %s110 = scalar_select %p107, %s108, %s109
      %p113 = pneg %p107
      %p114 = scmp.eq.s32.totalorder %s16, 1
      %p115 = por %p113, %p114
      %p116 = scmp.ne.s32.totalorder %s108, %s111
      %p117 = scmp.eq.s32.totalorder %s16, 0
      %p118 = por %p116, %p117
      %p119 = scmp.ne.s32.totalorder %s108, %s111
      %p120 = scmp.eq.s32.totalorder %s21, 1
      %p121 = por %p119, %p120
      %p122 = scmp.ne.s32.totalorder %s111, %s112
      %p123 = scmp.eq.s32.totalorder %s21, 0
      %p124 = por %p122, %p123
      %p125 = scmp.ne.s32.totalorder %s111, %s112
      %p126 = scmp.eq.s32.totalorder %s22, 1
      %p127 = por %p125, %p126
      %p129 = scmp.ne.s32.totalorder %s112, %s128
      %p130 = scmp.eq.s32.totalorder %s22, 0
      %p131 = por %p129, %p130
      %p132 = scmp.le.s32.totalorder 1, %s16
      %p133 = scmp.lt.s32.totalorder %s16, 3
      %p134 = pnand %p132, %p133
      %p135 = pneg %p134
      // Predicated region
      $region9: #{tpu_custom_call.1} parent=5 // pred_check
        _
      $region10: #{tpu_custom_call.1} parent=5 // pred_check_branch
        %137 = sbr.rel (%p134) target = $region12
      $region11: #{tpu_custom_call.1} parent=5 // pred_region
        %s138 = ssub.s32 %s16, 1
        // Predicated region
        $region13: #{tpu_custom_call.1} parent=11 // pred_check
          %p139 = pneg %p75
        $region14: #{tpu_custom_call.1} parent=11 // pred_check_branch
          %141 = sbr.rel (%p139) target = $region16
        $region15: #{tpu_custom_call.1} parent=11 // pred_region
          %s143 = ssub.s32 576, 576
          %144 = vsyncadd [#allocation6], %s143
          %s145 = sshll.u32 [#allocation5], 4
          %s146 = int_to_ptr.vmem [resolvable:$true] %s145
          %151 = dma.hbm_to_vmem [thread:$0]  %s1, 576, %s146, [#allocation6], 64, 64, 4
        $region16: #{tpu_custom_call.1} parent=11 // pred_fallthru
          _
        // Predicated region
        $region17: #{tpu_custom_call.1} parent=11 // pred_check
          %p152 = pneg %p96
        $region18: #{tpu_custom_call.1} parent=11 // pred_check_branch
          %154 = sbr.rel (%p152) target = $region20
        $region19: #{tpu_custom_call.1} parent=11 // pred_region
          _
        $region20: #{tpu_custom_call.1} parent=11 // pred_fallthru
          _
      $region12: #{tpu_custom_call.1} parent=5 // pred_fallthru
        _
      %p155 = scmp.lt.s32.totalorder %s16, 2
      // Predicated region
      $region21: #{tpu_custom_call.1} parent=5 // pred_check
        %p156 = pneg %p155
      $region22: #{tpu_custom_call.1} parent=5 // pred_check_branch
        %158 = sbr.rel (%p156) target = $region24
      $region23: #{tpu_custom_call.1} parent=5 // pred_region
        // Predicated region
        $region25: #{tpu_custom_call.1} parent=23 // pred_check
          %p159 = pneg %p48
        $region26: #{tpu_custom_call.1} parent=23 // pred_check_branch
          %161 = sbr.rel (%p159) target = $region28
        $region27: #{tpu_custom_call.1} parent=23 // pred_region
          %s162 = sand.u32 %s38, 1
          %s163 = scalar_lea.sflag [#allocation3], %s162
          %s164 = sand.u32 %s38, 1
          %s165 = smul.addr %s164, 32
          %s166 = scalar_lea.vmem [#allocation2], %s165
          %s168 = ssub.s32 512, 512
          %169 = vsyncadd %s163, %s168
          %s170 = smul.addr %s23, 8
          %s171 = smul.addr %s170, 64
          %s172 = scalar_lea.hbm %s0, %s171
          %s173 = sshll.u32 %s166, 4
          %s174 = int_to_ptr.vmem [resolvable:$true] %s173
          %179 = dma.hbm_to_vmem [thread:$0]  %s172, 512, %s174, %s163, 64, 64, 4
        $region28: #{tpu_custom_call.1} parent=23 // pred_fallthru
          _
      $region24: #{tpu_custom_call.1} parent=5 // pred_fallthru
        _
      %p180 = scmp.le.s32.totalorder 1, %s16
      %p181 = scmp.lt.s32.totalorder %s16, 3
      %p182 = pnand %p180, %p181
      %p183 = pneg %p182
      // Predicated region
      $region29: #{tpu_custom_call.1} parent=5 // pred_check
        _
      $region30: #{tpu_custom_call.1} parent=5 // pred_check_branch
        %185 = sbr.rel (%p182) target = $region32
      $region31: #{tpu_custom_call.1} parent=5 // pred_region
        %s186 = ssub.s32 %s16, 1
        %s187 = sand.u32 %s41, 1
        %s188 = scalar_lea.sflag [#allocation3], %s187
        %s189 = sand.u32 %s41, 1
        %s190 = smul.addr %s189, 32
        %s191 = scalar_lea.vmem [#allocation2], %s190
        // Predicated region
        $region33: #{tpu_custom_call.1} parent=31 // pred_check
          %p192 = pneg %p54
        $region34: #{tpu_custom_call.1} parent=31 // pred_check_branch
          %194 = sbr.rel (%p192) target = $region36
        $region35: #{tpu_custom_call.1} parent=31 // pred_region
          %195 = dma.done %s188, 512
        $region36: #{tpu_custom_call.1} parent=31 // pred_fallthru
          _
        // Predicated region
        $region37: #{tpu_custom_call.1} parent=31 // pred_check
          %p196 = pneg %p75
        $region38: #{tpu_custom_call.1} parent=31 // pred_check_branch
          %198 = sbr.rel (%p196) target = $region40
        $region39: #{tpu_custom_call.1} parent=31 // pred_region
          %199 = dma.done [#allocation6], 576
        $region40: #{tpu_custom_call.1} parent=31 // pred_fallthru
          _
        %s200 = sand.u32 %s41, 1
        %s201 = scalar_lea.sflag [#allocation3], %s200
        %s202 = sand.u32 %s41, 1
        %s203 = smul.addr %s202, 32
        %s204 = scalar_lea.vmem [#allocation2], %s203
        %p205 = pneg %p54
        %p206 = pneg %p51
        %p207 = pneg %p75
        %p208 = pneg %p72
        %p209 = pneg %p96
        %p210 = pneg %p93
        %p211 = pneg %p124
        %p212 = pneg %p121
        %s213 = sand.u32 %s111, 1
        %s214 = scalar_lea.sflag [#allocation4], %s213
        %s215 = sand.u32 %s111, 1
        %s216 = smul.addr %s215, 32
        %s217 = scalar_lea.vmem [#allocation7], %s216
        %s219 = smul.u32 %s26, 128
        %v220 = vld [vmem:[%s191] sm:$0xf]
        %v221 = vld [vmem:[%s191 + $0x4] sm:$0xf]
        %v222 = vld [vmem:[%s191 + $0x8] sm:$0xf]
        %v223 = vld [vmem:[%s191 + $0xc] sm:$0xf]
        %v224 = vld [vmem:[%s191 + $0x10] sm:$0xf]
        %v225 = vld [vmem:[%s191 + $0x14] sm:$0xf]
        %v226 = vld [vmem:[%s191 + $0x18] sm:$0xf]
        %v227 = vld [vmem:[%s191 + $0x1c] sm:$0xf]
        %s228 = sshra.s32 %s219, 7
        %s229 = sand.u32 %s219, 127
        %s230 = smul.addr %s228, 4
        %s231 = scalar_lea.vmem [#allocation5], %s230
        %v232 = vld [vmem:[%s231] sm:$0xf]
        %v233 = vld [vmem:[%s231 + $0x4] sm:$0xf]
        %v234 = vld [vmem:[%s231 + $0x8] sm:$0xf]
        %v235 = vld [vmem:[%s231 + $0xc] sm:$0xf]
        %v236 = vld [vmem:[%s231 + $0x10] sm:$0xf]
        %v237 = vld [vmem:[%s231 + $0x14] sm:$0xf]
        %v238 = vld [vmem:[%s231 + $0x18] sm:$0xf]
        %v239 = vld [vmem:[%s231 + $0x1c] sm:$0xf]
        %v240 = vld [vmem:[%s231 + $0x20] sm:$0xf]
        %s241 = scalar_lea.vmem %s2, %s228
        %v242 = vld [vmem:[%s241] sm:$0x1]
        %v244 = vlaneseq
        %v245 = vshrl.u32 %v244, 7
        %v246 = vsub.s32 0, %v245
        %v247 = vrot.slane %v242, %v246
        %v257 = vunpack.c.l.b16 %v220
        %v258 = vunpack.c.l.b16 %v221
        %v259 = vunpack.c.l.b16 %v222
        %v260 = vunpack.c.l.b16 %v223
        %v261 = vunpack.c.l.b16 %v224
        %v262 = vunpack.c.l.b16 %v225
        %v263 = vunpack.c.l.b16 %v226
        %v264 = vunpack.c.l.b16 %v227
        %v265 = vpack.c.b16 %v258, %v257
        %v266 = vpack.c.b16 %v260, %v259
        %v267 = vpack.c.b16 %v262, %v261
        %v268 = vpack.c.b16 %v264, %v263
        %v278 = vunpack.c.l.b16 %v232
        %v279 = vunpack.c.l.b16 %v233
        %v280 = vunpack.c.l.b16 %v234
        %v281 = vunpack.c.l.b16 %v235
        %v282 = vunpack.c.l.b16 %v236
        %v283 = vunpack.c.l.b16 %v237
        %v284 = vunpack.c.l.b16 %v238
        %v285 = vunpack.c.l.b16 %v239
        %v286 = vunpack.c.l.b16 %v240
        %v287 = vpack.c.b16 %v279, %v278
        %v288 = vpack.c.b16 %v281, %v280
        %v289 = vpack.c.b16 %v283, %v282
        %v290 = vpack.c.b16 %v285, %v284
        %v291 = vpack.c.b16 %v286, %v286
        %vm296 = vcmask 588800
        %v298 = vsel %vm296, %v265, 0
        %v301 = vsel %vm296, %v266, 0
        %v304 = vsel %vm296, %v267, 0
        %v307 = vsel %vm296, %v268, 0
        %vm309 = vcmask 1043456
        %v311 = vsel %vm309, %v291, 0
        %313 = vmatprep.subr.bf16.mxu0 0
        %314 = vmatpush1.bf16.msra.mxu0 %v287
        %315 = vmatprep.subr.bf16.mxu0 0
        %316 = vmatpush1.bf16.msra.mxu0 %v288
        %317 = vmatprep.subr.bf16.mxu0 0
        %318 = vmatpush1.bf16.msra.mxu0 %v289
        %319 = vmatprep.subr.bf16.mxu0 0
        %320 = vmatpush1.bf16.msra.mxu0 %v290
        %321 = vmatprep.subr.bf16.mxu0 0
        %322 = vmatpush1.bf16.msra.mxu0 %v311
        %323 = vmatprep.subr.bf16.mxu0 0
        %324 = vmatpush1.bf16.msra.mxu0 0
        %325 = vmatprep.subr.bf16.mxu0 0
        %326 = vmatpush1.bf16.msra.mxu0 0
        %327 = vmatprep.subr.bf16.mxu0 0
        %328 = vmatpush1.bf16.msra.mxu0 0
        %329 = vmatprep.subr.bf16.mxu0 0
        %330 = vmatpush1.bf16.msra.mxu0 0
        %331 = vmatprep.subr.bf16.mxu0 0
        %332 = vmatpush1.bf16.msra.mxu0 0
        %333 = vmatprep.subr.bf16.mxu0 0
        %334 = vmatpush1.bf16.msra.mxu0 0
        %335 = vmatprep.subr.bf16.mxu0 0
        %336 = vmatpush1.bf16.msra.mxu0 0
        %337 = vmatprep.subr.bf16.mxu0 0
        %338 = vmatpush1.bf16.msra.mxu0 0
        %339 = vmatprep.subr.bf16.mxu0 0
        %340 = vmatpush1.bf16.msra.mxu0 0
        %341 = vmatprep.subr.bf16.mxu0 0
        %342 = vmatpush1.bf16.msra.mxu0 0
        %343 = vmatprep.subr.bf16.mxu0 0
        %344 = vmatpush1.bf16.msra.mxu0 0
        %345 = vmatprep.mubr.bf16.mxu0 0
        %346 = vmatmul.mubr.bf16.gmra.mrb[0].mxu0 %v298
        %v347 = vpop.f32.mrb[0].mxu0
        %v348 = vadd.f32 %v247, %v347
        %v349 = vpop.f32.mrb[0].mxu0
        %v350 = vpop.f32.mrb[0].mxu0
        %v351 = vadd.f32 %v247, %v350
        %v352 = vpop.f32.mrb[0].mxu0
        %353 = vmatprep.mubr.bf16.mxu0 0
        %354 = vmatmul.mubr.bf16.gmra.mrb[0].mxu0 %v301
        %v355 = vpop.f32.mrb[0].mxu0
        %v356 = vadd.f32 %v247, %v355
        %v357 = vpop.f32.mrb[0].mxu0
        %v358 = vpop.f32.mrb[0].mxu0
        %v359 = vadd.f32 %v247, %v358
        %v360 = vpop.f32.mrb[0].mxu0
        %361 = vmatprep.mubr.bf16.mxu0 0
        %362 = vmatmul.mubr.bf16.gmra.mrb[0].mxu0 %v304
        %v363 = vpop.f32.mrb[0].mxu0
        %v364 = vadd.f32 %v247, %v363
        %v365 = vpop.f32.mrb[0].mxu0
        %v366 = vpop.f32.mrb[0].mxu0
        %v367 = vadd.f32 %v247, %v366
        %v368 = vpop.f32.mrb[0].mxu0
        %369 = vmatprep.mubr.bf16.mxu0 0
        %370 = vmatmul.mubr.bf16.gmra.mrb[0].mxu0 %v307
        %v371 = vpop.f32.mrb[0].mxu0
        %v372 = vadd.f32 %v247, %v371
        %v373 = vpop.f32.mrb[0].mxu0
        %v374 = vpop.f32.mrb[0].mxu0
        %v375 = vadd.f32 %v247, %v374
        %v376 = vpop.f32.mrb[0].mxu0
        %377 = vdwg.mxu0
        %v378 = vmul.f32 %v348, 0.01
        %v379 = vmul.f32 %v351, 0.01
        %v380 = vmul.f32 %v356, 0.01
        %v381 = vmul.f32 %v359, 0.01
        %v382 = vmul.f32 %v364, 0.01
        %v383 = vmul.f32 %v367, 0.01
        %v384 = vmul.f32 %v372, 0.01
        %v385 = vmul.f32 %v375, 0.01
        %v386 = vmax.f32 %v348, %v378
        %v387 = vmax.f32 %v351, %v379
        %v388 = vmax.f32 %v356, %v380
        %v389 = vmax.f32 %v359, %v381
        %v390 = vmax.f32 %v364, %v382
        %v391 = vmax.f32 %v367, %v383
        %v392 = vmax.f32 %v372, %v384
        %v393 = vmax.f32 %v375, %v385
        %v394 = vpack.c.bf16 %v386, %v386
        %v395 = vpack.c.bf16 %v387, %v387
        %v396 = vpack.c.bf16 %v388, %v388
        %v397 = vpack.c.bf16 %v389, %v389
        %v398 = vpack.c.bf16 %v390, %v390
        %v399 = vpack.c.bf16 %v391, %v391
        %v400 = vpack.c.bf16 %v392, %v392
        %v401 = vpack.c.bf16 %v393, %v393
        %402 = vst [vmem:[%s217] sm:$0xf] %v394
        %403 = vst [vmem:[%s217 + $0x4] sm:$0xf] %v395
        %404 = vst [vmem:[%s217 + $0x8] sm:$0xf] %v396
        %405 = vst [vmem:[%s217 + $0xc] sm:$0xf] %v397
        %406 = vst [vmem:[%s217 + $0x10] sm:$0xf] %v398
        %407 = vst [vmem:[%s217 + $0x14] sm:$0xf] %v399
        %408 = vst [vmem:[%s217 + $0x18] sm:$0xf] %v400
        %409 = vst [vmem:[%s217 + $0x1c] sm:$0xf] %v401
        %s410 = sand.u32 %s111, 1
        %s411 = scalar_lea.sflag [#allocation4], %s410
        %s412 = sand.u32 %s111, 1
        %s413 = smul.addr %s412, 32
        %s414 = scalar_lea.vmem [#allocation7], %s413
        // Predicated region
        $region41: #{tpu_custom_call.1} parent=31 // pred_check
          %p415 = pneg %p121
        $region42: #{tpu_custom_call.1} parent=31 // pred_check_branch
          %417 = sbr.rel (%p415) target = $region44
        $region43: #{tpu_custom_call.1} parent=31 // pred_region
          %s419 = ssub.s32 512, 512
          %420 = vsyncadd %s411, %s419
          %s421 = smul.addr %s25, 8
          %s422 = sadd.s32 %s26, %s421
          %s423 = smul.addr %s422, 64
          %s424 = scalar_lea.hbm %s3, %s423
          %s425 = sshll.u32 %s414, 4
          %s426 = int_to_ptr.vmem [resolvable:$true] %s425
          %431 = dma.vmem_to_hbm [thread:$0]  %s426, 512, %s424, %s411, 64, 64, 4
        $region44: #{tpu_custom_call.1} parent=31 // pred_fallthru
          _
      $region32: #{tpu_custom_call.1} parent=5 // pred_fallthru
        _
      %p432 = scmp.le.s32.totalorder 2, %s16
      // Predicated region
      $region45: #{tpu_custom_call.1} parent=5 // pred_check
        %p433 = pneg %p432
      $region46: #{tpu_custom_call.1} parent=5 // pred_check_branch
        %435 = sbr.rel (%p433) target = $region48
      $region47: #{tpu_custom_call.1} parent=5 // pred_region
        %s436 = ssub.s32 %s16, 2
        // Predicated region
        $region49: #{tpu_custom_call.1} parent=47 // pred_check
          %p437 = pneg %p127
        $region50: #{tpu_custom_call.1} parent=47 // pred_check_branch
          %439 = sbr.rel (%p437) target = $region52
        $region51: #{tpu_custom_call.1} parent=47 // pred_region
          %s440 = sand.u32 %s112, 1
          %s441 = scalar_lea.sflag [#allocation4], %s440
          %s442 = sand.u32 %s112, 1
          %s443 = smul.addr %s442, 32
          %s444 = scalar_lea.vmem [#allocation7], %s443
          %445 = dma.done %s441, 512
        $region52: #{tpu_custom_call.1} parent=47 // pred_fallthru
          _
      $region48: #{tpu_custom_call.1} parent=5 // pred_fallthru
        _
    $region6: #{tpu_custom_call.1} parent=1 // loop_footer
      %s20 = sadd.s32 1, %s16
    $region7: #{tpu_custom_call.1} parent=1 // loop_footer_branch
      %15 = sbr.rel target = $region3
    $region8: #{tpu_custom_call.1} parent=1 // loop_exit
      _
    %446 = vsyncpa [#allocation3], 1
    %s447 = scalar_lea.sflag [#allocation3], 1
    %448 = vsyncpa %s447, 1
    %449 = vsyncpa [#allocation6], 1
    %450 = vsyncpa [#allocation4], 1
    %s451 = scalar_lea.sflag [#allocation4], 1
    %452 = vsyncpa %s451, 1

</llo_original>
